<compile_context>
chip_gen: v7x
topology: tpu7x:2x2x1
jax: 0.10.0
libtpu: 0.0.40
codegen_flags: <defaults>
</compile_context>

<pallas_src>
import functools

import jax
import jax.numpy as jnp
from jax import lax
from jax.experimental import pallas as pl
from jax.experimental.pallas import tpu as pltpu


# ------------------------------- helpers -------------------------------------

def _round_up(n, m):
    return ((n + m - 1) // m) * m


def _choose_block_rows(R, D, itemsize, *, target_tile_bytes=2 << 20,
                       max_rows=1024):
    """Largest row tile (multiple of 8) with tile_bytes <= ~2 MiB, capped.

    With 2 inputs + 1 output double-buffered this keeps total VMEM well under
    the 32 MiB scoped default on v7x while staying near the HBM roofline on
    v5e/v6e/v7x (tiles >= ~512 rows x 128 lanes).
    """
    rows = target_tile_bytes // max(1, D * itemsize)
    rows = int(max(8, min(max_rows, rows)))
    rows = (rows // 8) * 8
    rows = min(rows, _round_up(R, 8))
    return max(8, rows)


_COMPILER_PARAMS = pltpu.CompilerParams(
    dimension_semantics=("parallel",),
    vmem_limit_bytes=48 << 20,   # > 32 MiB scoped default, < 64 MiB v7x physical
)


# ----------------------------- LayerNorm kernel ------------------------------

def _layernorm_kernel(x_ref, gamma_ref, beta_ref, o_ref, *, eps):
    x = x_ref[...].astype(jnp.float32)                     # (rows, D)
    mean = jnp.mean(x, axis=-1, keepdims=True)
    xc = x - mean
    var = jnp.mean(xc * xc, axis=-1, keepdims=True)
    inv = lax.rsqrt(var + eps)
    y = xc * inv * gamma_ref[...] + beta_ref[...]          # gamma/beta: (1, D) f32
    o_ref[...] = y.astype(o_ref.dtype)


def layer_norm_pallas(x2d, gamma, beta, *, eps=1e-5, block_rows=None):
    R, D = x2d.shape
    if block_rows is None:
        block_rows = _choose_block_rows(R, D, x2d.dtype.itemsize)
    Rp = _round_up(R, block_rows)
    xp = jnp.pad(x2d, ((0, Rp - R), (0, 0))) if Rp != R else x2d

    out = pl.pallas_call(
        functools.partial(_layernorm_kernel, eps=eps),
        out_shape=jax.ShapeDtypeStruct((Rp, D), x2d.dtype),
        grid=(Rp // block_rows,),
        in_specs=[
            pl.BlockSpec((block_rows, D), lambda i: (i, 0)),
            pl.BlockSpec((1, D), lambda i: (0, 0)),
            pl.BlockSpec((1, D), lambda i: (0, 0)),
        ],
        out_specs=pl.BlockSpec((block_rows, D), lambda i: (i, 0)),
        compiler_params=_COMPILER_PARAMS,
    )(xp, gamma.reshape(1, D).astype(jnp.float32),
      beta.reshape(1, D).astype(jnp.float32))
    return out[:R] if Rp != R else out


# ------------------------ dropout + residual-add kernel -----------------------

def _keep_mask(seed_i32, global_row0, shape, p):
    """Deterministic per-element keep mask, P(keep) = 1 - p.

    Counter-based hash over the global element index + seed (murmur3 fmix32).
    Pure integer VPU ops; portable to interpret mode (unlike pltpu.prng_seed).
    """
    rows, cols = shape
    r = lax.broadcasted_iota(jnp.int32, shape, 0) + global_row0
    c = lax.broadcasted_iota(jnp.int32, shape, 1)
    u = (r * jnp.int32(cols) + c).astype(jnp.uint32)
    u = u * jnp.uint32(2654435761)
    u = u ^ (seed_i32.astype(jnp.uint32) * jnp.uint32(0x9E3779B9))
    u = u ^ (u >> 16)
    u = u * jnp.uint32(0x85EBCA6B)
    u = u ^ (u >> 13)
    u = u * jnp.uint32(0xC2B2AE35)
    u = u ^ (u >> 16)
    thresh = jnp.uint32(int(round(p * float(1 << 24))))
    return (u >> 8) >= thresh                              # top 24 bits vs p


def _dropout_add_kernel(seed_ref, x_ref, y_ref, o_ref, *, p, train, block_rows):
    x = x_ref[...]
    y = y_ref[...]
    if train and p > 0.0:
        keep = _keep_mask(seed_ref[0], pl.program_id(0) * block_rows,
                          y.shape, p)
        scale = jnp.asarray(1.0 / (1.0 - p), dtype=y.dtype)
        y = jnp.where(keep, y * scale, jnp.zeros_like(y))
    o_ref[...] = (x + y).astype(o_ref.dtype)


def dropout_residual_add_pallas(x2d, y2d, *, p, train, seed, block_rows=None):
    R, D = x2d.shape
    if block_rows is None:
        block_rows = _choose_block_rows(R, D, x2d.dtype.itemsize)
    Rp = _round_up(R, block_rows)
    if Rp != R:
        x2d = jnp.pad(x2d, ((0, Rp - R), (0, 0)))
        y2d = jnp.pad(y2d, ((0, Rp - R), (0, 0)))

    kernel = functools.partial(_dropout_add_kernel, p=p, train=train,
                               block_rows=block_rows)
    out = pl.pallas_call(
        kernel,
        out_shape=jax.ShapeDtypeStruct((Rp, D), x2d.dtype),
        grid=(Rp // block_rows,),
        in_specs=[
            pl.BlockSpec(memory_space=pltpu.MemorySpace.SMEM),   # seed scalar
            pl.BlockSpec((block_rows, D), lambda i: (i, 0)),
            pl.BlockSpec((block_rows, D), lambda i: (i, 0)),
        ],
        out_specs=pl.BlockSpec((block_rows, D), lambda i: (i, 0)),
        compiler_params=_COMPILER_PARAMS,
    )(jnp.asarray([seed], jnp.int32), x2d, y2d)
    return out[:R] if Rp != R else out


# ------------------------------ module wrapper --------------------------------

def residual_connection(x, sublayer, gamma, beta, *,
                        dropout_p=0.1, train=False, seed=0, eps=1e-5):
    """x: (B, S, D). Returns x + dropout(sublayer(LayerNorm(x)))."""
    B, S, D = x.shape
    x2d = x.reshape(B * S, D)

    normed = layer_norm_pallas(x2d, gamma, beta, eps=eps)       # Pallas kernel
    sub_out = sublayer(normed.reshape(B, S, D))                 # plain-JAX glue
    sub2d = sub_out.reshape(B * S, D).astype(x.dtype)

    out2d = dropout_residual_add_pallas(
        x2d, sub2d, p=dropout_p, train=train, seed=seed)        # Pallas kernel
    return out2d.reshape(B, S, D)


# ----------------------------------- main --------------------------------------

if __name__ == "__main__":
    B, S, D = 2, 8, 128          # lane-dense embed_dim (multiple of 128)
    key = jax.random.PRNGKey(0)
    kx, kw = jax.random.split(key)

    x = jax.random.normal(kx, (B, S, D), dtype=jnp.float32)

    # LayerNorm parameters, as in __init__: gamma = 1, beta = 0.
    gamma = jnp.ones((D,), jnp.float32)
    beta = jnp.zeros((D,), jnp.float32)

    # A simple deterministic sublayer (the module takes an arbitrary callable).
    W = 0.02 * jax.random.normal(kw, (D, D), dtype=jnp.float32)

    def sublayer(h):
        return jnp.tanh(jnp.dot(h, W))

    # Eval-mode forward (dropout = identity), matches PyTorch .eval().
    out = residual_connection(x, sublayer, gamma, beta,
                              dropout_p=0.1, train=False, seed=0)
    out = jax.block_until_ready(out)

    # Reference check in plain JAX.
    mu = jnp.mean(x, axis=-1, keepdims=True)
    var = jnp.mean((x - mu) ** 2, axis=-1, keepdims=True)
    normed_ref = (x - mu) * lax.rsqrt(var + 1e-5) * gamma + beta
    ref = x + sublayer(normed_ref)
    assert jnp.allclose(out, ref, atol=1e-5, rtol=1e-5), "mismatch vs reference"

    # Exercise the training-mode (in-kernel hashed dropout) path once.
    out_train = residual_connection(x, sublayer, gamma, beta,
                                    dropout_p=0.1, train=True, seed=123)
    out_train = jax.block_until_ready(out_train)
    assert out_train.shape == x.shape
    assert bool(jnp.all(jnp.isfinite(out_train)))

    print("KERNEL_OK")
</pallas_src>

<mosaic_0001>
module attributes {stable_mosaic.version = 11 : i64} {
  func.func @_layernorm_kernel(%arg0: i32, %arg1: memref<16x128xf32, #tpu.memory_space<vmem>>, %arg2: memref<1x128xf32, #tpu.memory_space<vmem>>, %arg3: memref<1x128xf32, #tpu.memory_space<vmem>>, %arg4: memref<16x128xf32, #tpu.memory_space<vmem>>) attributes {dimension_semantics = [#tpu.dimension_semantics<parallel>], iteration_bounds = array<i64: 1>, scalar_prefetch = 0 : i64, scratch_operands = 0 : i64, tpu.core_type = #tpu.core_type<tc>, window_params = [{transform_indices = @transform_0, window_bounds = array<i64: 16, 128>}, {pipeline_mode = #tpu.pipeline_mode<synchronous>, transform_indices = @transform_1, window_bounds = array<i64: 1, 128>}, {pipeline_mode = #tpu.pipeline_mode<synchronous>, transform_indices = @transform_2, window_bounds = array<i64: 1, 128>}, {transform_indices = @transform_3, window_bounds = array<i64: 16, 128>}]} {
    %c0 = arith.constant 0 : index
    %c0_0 = arith.constant 0 : index
    %0 = vector.load %arg1[%c0, %c0_0] : memref<16x128xf32, #tpu.memory_space<vmem>>, vector<16x128xf32>
    %cst = arith.constant dense<0.000000e+00> : vector<16xf32>
    %1 = vector.multi_reduction <add>, %0, %cst [1] : vector<16x128xf32> to vector<16xf32>
    %2 = vector.shape_cast %1 : vector<16xf32> to vector<16x1xf32>
    %cst_1 = arith.constant 1.280000e+02 : f32
    %3 = vector.broadcast %cst_1 : f32 to vector<16x1xf32>
    %4 = arith.divf %2, %3 : vector<16x1xf32>
    %5 = vector.broadcast %4 : vector<16x1xf32> to vector<16x128xf32>
    %6 = arith.subf %0, %5 : vector<16x128xf32>
    %7 = arith.mulf %6, %6 : vector<16x128xf32>
    %cst_2 = arith.constant dense<0.000000e+00> : vector<16xf32>
    %8 = vector.multi_reduction <add>, %7, %cst_2 [1] : vector<16x128xf32> to vector<16xf32>
    %9 = vector.shape_cast %8 : vector<16xf32> to vector<16x1xf32>
    %cst_3 = arith.constant 1.280000e+02 : f32
    %10 = vector.broadcast %cst_3 : f32 to vector<16x1xf32>
    %11 = arith.divf %9, %10 : vector<16x1xf32>
    %cst_4 = arith.constant 9.99999974E-6 : f32
    %12 = vector.broadcast %cst_4 : f32 to vector<16x1xf32>
    %13 = arith.addf %11, %12 : vector<16x1xf32>
    %14 = math.rsqrt %13 : vector<16x1xf32>
    %15 = vector.broadcast %14 : vector<16x1xf32> to vector<16x128xf32>
    %16 = arith.mulf %6, %15 : vector<16x128xf32>
    %c0_5 = arith.constant 0 : index
    %c0_6 = arith.constant 0 : index
    %17 = vector.load %arg2[%c0_5, %c0_6] : memref<1x128xf32, #tpu.memory_space<vmem>>, vector<1x128xf32>
    %18 = vector.broadcast %17 : vector<1x128xf32> to vector<16x128xf32>
    %19 = arith.mulf %16, %18 : vector<16x128xf32>
    %c0_7 = arith.constant 0 : index
    %c0_8 = arith.constant 0 : index
    %20 = vector.load %arg3[%c0_7, %c0_8] : memref<1x128xf32, #tpu.memory_space<vmem>>, vector<1x128xf32>
    %21 = vector.broadcast %20 : vector<1x128xf32> to vector<16x128xf32>
    %22 = arith.addf %19, %21 : vector<16x128xf32>
    %c0_9 = arith.constant 0 : index
    %c0_10 = arith.constant 0 : index
    %23 = vector.load %arg4[%c0_9, %c0_10] : memref<16x128xf32, #tpu.memory_space<vmem>>, vector<16x128xf32>
    tpu.vector_store %arg4[%c0_9, %c0_10], %22 {strides = array<i32>} : memref<16x128xf32, #tpu.memory_space<vmem>>, vector<16x128xf32>,
    return
  }
  func.func @transform_0(%arg0: i32) -> (i32, i32) {
    %c0_i32 = arith.constant 0 : i32
    %c0_i32_0 = arith.constant 0 : i32
    return %arg0, %c0_i32 : i32, i32
  }
  func.func @transform_1(%arg0: i32) -> (i32, i32) {
    %c0_i32 = arith.constant 0 : i32
    %c0_i32_0 = arith.constant 0 : i32
    %c0_i32_1 = arith.constant 0 : i32
    return %c0_i32, %c0_i32_0 : i32, i32
  }
  func.func @transform_2(%arg0: i32) -> (i32, i32) {
    %c0_i32 = arith.constant 0 : i32
    %c0_i32_0 = arith.constant 0 : i32
    %c0_i32_1 = arith.constant 0 : i32
    return %c0_i32, %c0_i32_0 : i32, i32
  }
  func.func @transform_3(%arg0: i32) -> (i32, i32) {
    %c0_i32 = arith.constant 0 : i32
    %c0_i32_0 = arith.constant 0 : i32
    return %arg0, %c0_i32 : i32, i32
  }
}

</mosaic_0001>

<llo_original>
// kernel: tpu_custom_call.1
$region0: #{tpu_custom_call.1}
  #allocation0 [shape = 'u32[]', space=smem, size = 0x4, offset = 0x4, fixed_abs, tag = 'smem constant byte address 0x4 - core index']
  #allocation1 [shape = 'u32[144,128]{1,0:T(1,128)}', space=vmem, size = 0x12000, scoped, tag = 'internal scratch']
  %s0 = inlined_call_operand.hbm [shape: f32[16,128], index: 0, kind: input, shape index: {}]
  %s1 = inlined_call_operand.vmem [shape: f32[1,128], index: 1, kind: input, shape index: {}]
  %s2 = inlined_call_operand.vmem [shape: f32[1,128], index: 2, kind: input, shape index: {}]
  %s3 = inlined_call_operand.hbm [shape: f32[16,128], index: 3, kind: output, shape index: {}]
  %s4 = sld [smem:[#allocation0]]
  $region26: #{tpu_custom_call.1} parent=0
    _
  %s6 = ssub.s32 1, %s4
  %s7 = scalar_select 0, %s6, %s4
  $region1: #{tpu_custom_call.1} parent=0
    #allocation2 [shape = 'u8[8192]{0}', space=vmem, size = 0x2000, scoped, tag = 'input window, operand 0, single buffered']
    #allocation3 [shape = 's32[1]{0}', space=sflag, size = 0x4, scoped, tag = 'scoped memory for tpu_custom_call.1']
    #allocation4 [shape = 's32[1]{0}', space=sflag, size = 0x4, scoped, tag = 'scoped memory for tpu_custom_call.1']
    #allocation5 [shape = 'u8[8192]{0}', space=vmem, size = 0x2000, scoped, tag = 'output window, operand 0, single buffered']
    %8 = vsyncpa [#allocation3], 0
    %9 = vsyncpa [#allocation4], 0
    // Predicated region
    $region2: #{tpu_custom_call.1} parent=1 // pred_check
      _
    $region3: #{tpu_custom_call.1} parent=1 // pred_check_branch
      %11 = sbr.rel (0) target = $region5
    $region4: #{tpu_custom_call.1} parent=1 // pred_region
      %s13 = ssub.s32 256, 256
      %14 = vsyncadd [#allocation3], %s13
      %s15 = sshll.u32 [#allocation2], 4
      %s16 = int_to_ptr.vmem [resolvable:$true] %s15
      %21 = dma.hbm_to_vmem [thread:$0]  %s0, 256, %s16, [#allocation3], 128, 128, 8
    $region5: #{tpu_custom_call.1} parent=1 // pred_fallthru
      _
    // Predicated region
    $region6: #{tpu_custom_call.1} parent=1 // pred_check
      _
    $region7: #{tpu_custom_call.1} parent=1 // pred_check_branch
      %23 = sbr.rel (0) target = $region9
    $region8: #{tpu_custom_call.1} parent=1 // pred_region
      _
    $region9: #{tpu_custom_call.1} parent=1 // pred_fallthru
      _
    // Predicated region
    $region10: #{tpu_custom_call.1} parent=1 // pred_check
      _
    $region11: #{tpu_custom_call.1} parent=1 // pred_check_branch
      %25 = sbr.rel (0) target = $region13
    $region12: #{tpu_custom_call.1} parent=1 // pred_region
      _
    $region13: #{tpu_custom_call.1} parent=1 // pred_fallthru
      _
    // Predicated region
    $region14: #{tpu_custom_call.1} parent=1 // pred_check
      _
    $region15: #{tpu_custom_call.1} parent=1 // pred_check_branch
      %27 = sbr.rel (0) target = $region17
    $region16: #{tpu_custom_call.1} parent=1 // pred_region
      %28 = dma.done [#allocation3], 256
    $region17: #{tpu_custom_call.1} parent=1 // pred_fallthru
      _
    %v29 = vld [vmem:[#allocation2] sm:$0xff]
    %v30 = vld [vmem:[#allocation2 + $0x8] sm:$0xff]
    %31 = vadd.xlane.f32.xlu0 %v29
    %v32 = vpop.xlane.xlu0 %31
    %33 = vadd.xlane.f32.xlu0 %v30
    %v34 = vpop.xlane.xlu0 %33
    %v35 = vrcp.pop 128.0
    %v36 = vmul.f32 %v32, %v35
    %v37 = vmul.f32 %v34, %v35
    %v38 = vsub.f32 %v29, %v36
    %v39 = vsub.f32 %v30, %v37
    %v40 = vmul.f32 %v38, %v38
    %v41 = vmul.f32 %v39, %v39
    %42 = vadd.xlane.f32.xlu0 %v40
    %v43 = vpop.xlane.xlu0 %42
    %44 = vadd.xlane.f32.xlu0 %v41
    %v45 = vpop.xlane.xlu0 %44
    %v46 = vmul.f32 %v43, %v35
    %v47 = vmul.f32 %v45, %v35
    %v48 = vadd.f32 %v46, 1e-05
    %v49 = vadd.f32 %v47, 1e-05
    %v50 = vrsqrt.pop %v48
    %v51 = vrsqrt.pop %v49
    %v52 = vmul.f32 %v38, %v50
    %v53 = vmul.f32 %v39, %v51
    %v54 = vld [vmem:[%s1] sm:$0x1]
    %v56 = vlaneseq
    %v57 = vshrl.u32 %v56, 7
    %v58 = vsub.s32 0, %v57
    %v59 = vrot.slane %v54, %v58
    %v61 = vmul.f32 %v52, %v59
    %v62 = vmul.f32 %v53, %v59
    %v63 = vld [vmem:[%s2] sm:$0x1]
    %v65 = vlaneseq
    %v66 = vshrl.u32 %v65, 7
    %v67 = vsub.s32 0, %v66
    %v68 = vrot.slane %v63, %v67
    %v70 = vadd.f32 %v61, %v68
    %v71 = vadd.f32 %v62, %v68
    %72 = vst [vmem:[#allocation5] sm:$0xff] %v70
    %73 = vst [vmem:[#allocation5 + $0x8] sm:$0xff] %v71
    // Predicated region
    $region18: #{tpu_custom_call.1} parent=1 // pred_check
      _
    $region19: #{tpu_custom_call.1} parent=1 // pred_check_branch
      %75 = sbr.rel (0) target = $region21
    $region20: #{tpu_custom_call.1} parent=1 // pred_region
      %s77 = ssub.s32 256, 256
      %78 = vsyncadd [#allocation4], %s77
      %s79 = sshll.u32 [#allocation5], 4
      %s80 = int_to_ptr.vmem [resolvable:$true] %s79
      %85 = dma.vmem_to_hbm [thread:$0]  %s80, 256, %s3, [#allocation4], 128, 128, 8
    $region21: #{tpu_custom_call.1} parent=1 // pred_fallthru
      _
    // Predicated region
    $region22: #{tpu_custom_call.1} parent=1 // pred_check
      _
    $region23: #{tpu_custom_call.1} parent=1 // pred_check_branch
      %87 = sbr.rel (0) target = $region25
    $region24: #{tpu_custom_call.1} parent=1 // pred_region
      %88 = dma.done [#allocation4], 256
    $region25: #{tpu_custom_call.1} parent=1 // pred_fallthru
      _
    %89 = vsyncpa [#allocation3], 1
    %90 = vsyncpa [#allocation4], 1

</llo_original>
